<compile_context>
chip_gen: v7x
topology: tpu7x:2x2x1
jax: 0.10.0
libtpu: 0.0.40
codegen_flags: <defaults>
</compile_context>

<pallas_src>
import functools
import math

import jax
import jax.numpy as jnp
from jax import lax
from jax.experimental import pallas as pl
from jax.experimental.pallas import tpu as pltpu

_LANE = 128


def _cdiv(a: int, b: int) -> int:
    return -(-a // b)


def _tpu_config():
    """Per-generation tile size / chunk count / scoped-VMEM limit."""
    try:
        kind = jax.devices()[0].device_kind.lower()
    except Exception:  # pragma: no cover - defensive
        kind = ""
    if "v7" in kind:
        # v7x: 3.2 TB/s HBM, only 64 MiB VMEM, 2 TensorCores/chip.
        return dict(block_bytes=6 << 20, chunks=2, vmem_limit_bytes=48 << 20)
    if "v6" in kind:
        # v6e: ~1.4 TB/s HBM, 128 MiB VMEM (32 MiB scoped default).
        return dict(block_bytes=4 << 20, chunks=1, vmem_limit_bytes=64 << 20)
    # v5e / v5p / v4 / unknown: conservative tile, explicit headroom.
    return dict(block_bytes=2 << 20, chunks=1, vmem_limit_bytes=48 << 20)


def _mse_kernel(rep_ref, lab_ref, out_ref, *, tm, rows):
    """Accumulate per-(sublane,lane) partial sums of (rep - labels)^2.

    Grid = (chunk, tile).  The (8, 128) output block is carried across the
    inner ("arbitrary") tile axis and acts as the accumulator.  Rows at or
    beyond the true row count (last partial tile / redundant clamped tiles)
    are masked out, so no input padding is ever required.
    """
    c = pl.program_id(0)
    t = pl.program_id(1)

    @pl.when(t == 0)
    def _():
        out_ref[...] = jnp.zeros_like(out_ref)

    g = c * pl.num_programs(1) + t          # global (unclamped) tile index
    row0 = g * tm                           # first global row of this tile

    d = rep_ref[...].astype(jnp.float32) - lab_ref[...].astype(jnp.float32)
    sq = d * d
    # Mask rows past the true row count (handles the ragged last tile and any
    # fully-redundant clamped tile).  select() -> garbage padding cannot leak.
    local = lax.broadcasted_iota(jnp.int32, (tm, 1), 0)
    sq = jnp.where(row0 + local < rows, sq, 0.0)
    # Fold tm rows -> 8 sublanes with pure VPU adds (no cross-lane XLU work);
    # the reshape is a no-op relabeling of (8,128)-aligned f32 data.
    out_ref[...] += jnp.sum(sq.reshape(tm // 8, 8, _LANE), axis=0)


def mse_loss(
    rep: jax.Array,
    labels: jax.Array,
    *,
    target_block_bytes: int | None = None,
    num_chunks: int | None = None,
    vmem_limit_bytes: int | None = None,
) -> jax.Array:
    """Pallas TPU equivalent of torch.nn.MSELoss()(rep, labels) (mean reduction)."""
    assert rep.shape == labels.shape, "MSELoss requires matching shapes"
    total = math.prod(rep.shape)
    if total == 0:
        return jnp.float32(jnp.nan)  # torch nn.MSELoss on empty input -> nan

    cfg = _tpu_config()
    if target_block_bytes is None:
        target_block_bytes = cfg["block_bytes"]
    if num_chunks is None:
        num_chunks = cfg["chunks"]
    if vmem_limit_bytes is None:
        vmem_limit_bytes = cfg["vmem_limit_bytes"]

    itemsize = jnp.dtype(rep.dtype).itemsize
    # Sublane alignment for the block: 8 (f32) / 16 (bf16) / 32 (int8/fp8).
    row_align = 8 * max(1, 4 // itemsize)

    rows = total // _LANE                    # number of complete 128-lane rows
    if rows < row_align:
        # Too small for even one aligned tile; launch latency would dominate.
        d = rep.astype(jnp.float32) - labels.astype(jnp.float32)
        return jnp.sum(d * d) / total

    # --- choose tiling -------------------------------------------------------
    tm_cap = max(
        row_align,
        (target_block_bytes // (_LANE * itemsize)) // row_align * row_align,
    )
    tm = min(tm_cap, (rows // row_align) * row_align)
    tiles_total = _cdiv(rows, tm)
    nchunks = max(1, min(num_chunks, tiles_total))
    tiles_per_chunk = _cdiv(tiles_total, nchunks)

    # --- lane-dense (rows, 128) view; NO padding, NO full-tensor copy --------
    main_elems = rows * _LANE
    if main_elems == total:
        rep_main = rep.reshape(rows, _LANE)       # pure bitcast reshape
        lab_main = labels.reshape(rows, _LANE)
        tail_sum = jnp.float32(0.0)
    else:
        # Sub-row ragged tail (< 128 elements): tiny XLA reduction.
        fr = rep.reshape(-1)
        fl = labels.reshape(-1)
        rep_main = fr[:main_elems].reshape(rows, _LANE)
        lab_main = fl[:main_elems].reshape(rows, _LANE)
        dt = fr[main_elems:].astype(jnp.float32) - fl[main_elems:].astype(jnp.float32)
        tail_sum = jnp.sum(dt * dt)

    def in_index_map(c, t):
        # Clamp so a chunk with fewer real tiles never indexes past the array;
        # the redundant tile re-reads the last block and is fully masked out.
        return (jnp.minimum(c * tiles_per_chunk + t, tiles_total - 1), 0)

    in_spec = pl.BlockSpec((tm, _LANE), in_index_map)

    partials = pl.pallas_call(
        functools.partial(_mse_kernel, tm=tm, rows=rows),
        out_shape=jax.ShapeDtypeStruct((nchunks * 8, _LANE), jnp.float32),
        grid_spec=pltpu.PrefetchScalarGridSpec(
            num_scalar_prefetch=0,
            grid=(nchunks, tiles_per_chunk),
            in_specs=[in_spec, in_spec],
            out_specs=pl.BlockSpec((8, _LANE), lambda c, t: (c, 0)),
        ),
        compiler_params=pltpu.CompilerParams(
            # chunk axis may be sharded across TensorCores (v7x megacore);
            # the tile axis is a carried reduction.
            dimension_semantics=("parallel", "arbitrary"),
            vmem_limit_bytes=vmem_limit_bytes,
        ),
        cost_estimate=pl.CostEstimate(
            flops=3 * main_elems,
            transcendentals=0,
            bytes_accessed=2 * main_elems * itemsize + nchunks * 8 * _LANE * 4,
        ),
    )(rep_main, lab_main)

    # Tiny final reduction + mean over the TRUE element count.
    return (jnp.sum(partials) + tail_sum) / total


if __name__ == "__main__":
    key = jax.random.PRNGKey(0)
    k1, k2, k3, k4, k5, k6, k7, k8 = jax.random.split(key, 8)

    def ref_mse(a, b):
        return jnp.mean((a.astype(jnp.float32) - b.astype(jnp.float32)) ** 2)

    # Case 1: sentence-embedding distillation shapes, f32, fully aligned.
    rep = jax.random.normal(k1, (16, 128), dtype=jnp.float32)
    lab = jax.random.normal(k2, (16, 128), dtype=jnp.float32)
    loss = jax.block_until_ready(mse_loss(rep, lab))
    assert jnp.allclose(loss, ref_mse(rep, lab), rtol=1e-5, atol=1e-6), (loss, ref_mse(rep, lab))

    # Case 2: ragged row count + bf16 inputs (kept bf16 in HBM, cast in-kernel,
    # last tile masked in-kernel -> no padding copy).
    rep_b = jax.random.normal(k3, (7, 384), dtype=jnp.bfloat16)
    lab_b = jax.random.normal(k4, (7, 384), dtype=jnp.bfloat16)
    loss_b = jax.block_until_ready(mse_loss(rep_b, lab_b))
    assert jnp.allclose(loss_b, ref_mse(rep_b, lab_b), rtol=1e-4, atol=1e-5), (loss_b, ref_mse(rep_b, lab_b))

    # Case 3: force multi-tile accumulation + 2-chunk grid (+ clamped redundant
    # tile: 5 tiles split over 2 chunks) with a small override block size.
    rep_c = jax.random.normal(k5, (80, 512), dtype=jnp.float32)
    lab_c = jax.random.normal(k6, (80, 512), dtype=jnp.float32)
    loss_c = jax.block_until_ready(
        mse_loss(rep_c, lab_c, target_block_bytes=32 * 1024, num_chunks=2)
    )
    assert jnp.allclose(loss_c, ref_mse(rep_c, lab_c), rtol=1e-5, atol=1e-6), (loss_c, ref_mse(rep_c, lab_c))

    # Case 4: total not a multiple of 128 -> in-kernel masked last tile plus a
    # tiny XLA sub-row tail.
    rep_d = jax.random.normal(k7, (9, 200), dtype=jnp.float32)
    lab_d = jax.random.normal(k8, (9, 200), dtype=jnp.float32)
    loss_d = jax.block_until_ready(mse_loss(rep_d, lab_d))
    assert jnp.allclose(loss_d, ref_mse(rep_d, lab_d), rtol=1e-5, atol=1e-6), (loss_d, ref_mse(rep_d, lab_d))

    print("KERNEL_OK")
</pallas_src>

<mosaic_0001>
module attributes {stable_mosaic.version = 11 : i64} {
  func.func @_mse_kernel(%arg0: i32, %arg1: i32, %arg2: memref<16x128xf32, #tpu.memory_space<vmem>>, %arg3: memref<16x128xf32, #tpu.memory_space<vmem>>, %arg4: memref<8x128xf32, #tpu.memory_space<vmem>>) attributes {dimension_semantics = [#tpu.dimension_semantics<parallel>, #tpu.dimension_semantics<arbitrary>], iteration_bounds = array<i64: 1, 1>, scalar_prefetch = 0 : i64, scratch_operands = 0 : i64, tpu.core_type = #tpu.core_type<tc>, window_params = [{transform_indices = @transform_0, window_bounds = array<i64: 16, 128>}, {transform_indices = @transform_1, window_bounds = array<i64: 16, 128>}, {transform_indices = @transform_2, window_bounds = array<i64: 8, 128>}]} {
    %c0_i32 = arith.constant 0 : i32
    %0 = arith.cmpi eq, %arg1, %c0_i32 : i32
    %1 = arith.extui %0 : i1 to i32
    %c0_i32_0 = arith.constant 0 : i32
    %2 = arith.cmpi ne, %1, %c0_i32_0 : i32
    scf.if %2 {
      %cst_10 = arith.constant 0.000000e+00 : f32
      %24 = vector.broadcast %cst_10 : f32 to vector<8x128xf32>
      %c0_11 = arith.constant 0 : index
      %c0_12 = arith.constant 0 : index
      %25 = vector.load %arg4[%c0_11, %c0_12] : memref<8x128xf32, #tpu.memory_space<vmem>>, vector<8x128xf32>
      tpu.vector_store %arg4[%c0_11, %c0_12], %24 {strides = array<i32>} : memref<8x128xf32, #tpu.memory_space<vmem>>, vector<8x128xf32>,
    } else {
    }
    %c1_i32 = arith.constant 1 : i32
    %3 = arith.muli %arg0, %c1_i32 : i32
    %4 = arith.addi %3, %arg1 : i32
    %c16_i32 = arith.constant 16 : i32
    %5 = arith.muli %4, %c16_i32 : i32
    %c0 = arith.constant 0 : index
    %c0_1 = arith.constant 0 : index
    %6 = vector.load %arg2[%c0, %c0_1] : memref<16x128xf32, #tpu.memory_space<vmem>>, vector<16x128xf32>
    %c0_2 = arith.constant 0 : index
    %c0_3 = arith.constant 0 : index
    %7 = vector.load %arg3[%c0_2, %c0_3] : memref<16x128xf32, #tpu.memory_space<vmem>>, vector<16x128xf32>
    %8 = arith.subf %6, %7 : vector<16x128xf32>
    %9 = arith.mulf %8, %8 : vector<16x128xf32>
    %10 = tpu.iota {dimensions = array<i32: 0>} : vector<16x1xi32>
    %11 = vector.broadcast %5 : i32 to vector<16x1xi32>
    %12 = arith.addi %11, %10 : vector<16x1xi32>
    %c16_i32_4 = arith.constant 16 : i32
    %13 = vector.broadcast %c16_i32_4 : i32 to vector<16x1xi32>
    %14 = arith.cmpi slt, %12, %13 : vector<16x1xi32>
    %cst = arith.constant 0.000000e+00 : f32
    %15 = vector.shape_cast %14 : vector<16x1xi1> to vector<16x1xi1>
    %16 = vector.broadcast %15 : vector<16x1xi1> to vector<16x128xi1>
    %17 = vector.broadcast %cst : f32 to vector<16x128xf32>
    %18 = arith.select %16, %9, %17 : vector<16x128xi1>, vector<16x128xf32>
    %c0_5 = arith.constant 0 : index
    %c0_6 = arith.constant 0 : index
    %19 = vector.load %arg4[%c0_5, %c0_6] : memref<8x128xf32, #tpu.memory_space<vmem>>, vector<8x128xf32>
    %20 = vector.shape_cast %18 : vector<16x128xf32> to vector<2x8x128xf32>
    %cst_7 = arith.constant dense<0.000000e+00> : vector<8x128xf32>
    %21 = vector.multi_reduction <add>, %20, %cst_7 [0] : vector<2x8x128xf32> to vector<8x128xf32>
    %22 = arith.addf %19, %21 : vector<8x128xf32>
    %c0_8 = arith.constant 0 : index
    %c0_9 = arith.constant 0 : index
    %23 = vector.load %arg4[%c0_8, %c0_9] : memref<8x128xf32, #tpu.memory_space<vmem>>, vector<8x128xf32>
    tpu.vector_store %arg4[%c0_8, %c0_9], %22 {strides = array<i32>} : memref<8x128xf32, #tpu.memory_space<vmem>>, vector<8x128xf32>,
    return
  }
  func.func @transform_0(%arg0: i32, %arg1: i32) -> (i32, i32) {
    %c1_i32 = arith.constant 1 : i32
    %0 = arith.muli %arg0, %c1_i32 : i32
    %1 = arith.addi %0, %arg1 : i32
    %c0_i32 = arith.constant 0 : i32
    %2 = arith.minsi %1, %c0_i32 : i32
    %c0_i32_0 = arith.constant 0 : i32
    %c0_i32_1 = arith.constant 0 : i32
    return %2, %c0_i32_0 : i32, i32
  }
  func.func @transform_1(%arg0: i32, %arg1: i32) -> (i32, i32) {
    %c1_i32 = arith.constant 1 : i32
    %0 = arith.muli %arg0, %c1_i32 : i32
    %1 = arith.addi %0, %arg1 : i32
    %c0_i32 = arith.constant 0 : i32
    %2 = arith.minsi %1, %c0_i32 : i32
    %c0_i32_0 = arith.constant 0 : i32
    %c0_i32_1 = arith.constant 0 : i32
    return %2, %c0_i32_0 : i32, i32
  }
  func.func @transform_2(%arg0: i32, %arg1: i32) -> (i32, i32) {
    %c0_i32 = arith.constant 0 : i32
    %c0_i32_0 = arith.constant 0 : i32
    return %arg0, %c0_i32 : i32, i32
  }
}

</mosaic_0001>

<llo_original>
// kernel: tpu_custom_call.1
$region0: #{tpu_custom_call.1}
  #allocation0 [shape = 'u32[]', space=smem, size = 0x4, offset = 0x4, fixed_abs, tag = 'smem constant byte address 0x4 - core index']
  #allocation1 [shape = 'u32[144,128]{1,0:T(1,128)}', space=vmem, size = 0x12000, scoped, tag = 'internal scratch']
  %s0 = inlined_call_operand.hbm [shape: f32[16,128], index: 0, kind: input, shape index: {}]
  %s1 = inlined_call_operand.hbm [shape: f32[16,128], index: 1, kind: input, shape index: {}]
  %s2 = inlined_call_operand.hbm [shape: f32[8,128], index: 2, kind: output, shape index: {}]
  %s3 = sld [smem:[#allocation0]]
  $region30: #{tpu_custom_call.1} parent=0
    _
  %s5 = ssub.s32 1, %s3
  %s6 = scalar_select 0, %s5, %s3
  $region1: #{tpu_custom_call.1} parent=0
    #allocation2 [shape = 'u8[8192]{0}', space=vmem, size = 0x2000, scoped, tag = 'input window, operand 0, single buffered']
    #allocation3 [shape = 's32[1]{0}', space=sflag, size = 0x4, scoped, tag = 'scoped memory for tpu_custom_call.1']
    #allocation4 [shape = 's32[1]{0}', space=sflag, size = 0x4, scoped, tag = 'scoped memory for tpu_custom_call.1']
    #allocation5 [shape = 'u8[8192]{0}', space=vmem, size = 0x2000, scoped, tag = 'input window, operand 1, single buffered']
    #allocation6 [shape = 's32[1]{0}', space=sflag, size = 0x4, scoped, tag = 'scoped memory for tpu_custom_call.1']
    #allocation7 [shape = 'u8[4096]{0}', space=vmem, size = 0x1000, scoped, tag = 'output window, operand 0, single buffered']
    %7 = vsyncpa [#allocation3], 0
    %8 = vsyncpa [#allocation6], 0
    %9 = vsyncpa [#allocation4], 0
    // Predicated region
    $region2: #{tpu_custom_call.1} parent=1 // pred_check
      _
    $region3: #{tpu_custom_call.1} parent=1 // pred_check_branch
      %11 = sbr.rel (0) target = $region5
    $region4: #{tpu_custom_call.1} parent=1 // pred_region
      %s12 = sadd.s32 0, 0
      %p13 = scmp.lt.s32.totalorder %s12, 0
      %s14 = scalar_select %p13, %s12, 0
      %s15 = smul.u32 2, %s14
      %s17 = ssub.s32 256, 256
      %18 = vsyncadd [#allocation3], %s17
      %s19 = smul.addr %s15, 128
      %s20 = scalar_lea.hbm %s0, %s19
      %s21 = sshll.u32 [#allocation2], 4
      %s22 = int_to_ptr.vmem [resolvable:$true] %s21
      %27 = dma.hbm_to_vmem [thread:$0]  %s20, 256, %s22, [#allocation3], 128, 128, 8
    $region5: #{tpu_custom_call.1} parent=1 // pred_fallthru
      _
    // Predicated region
    $region6: #{tpu_custom_call.1} parent=1 // pred_check
      _
    $region7: #{tpu_custom_call.1} parent=1 // pred_check_branch
      %29 = sbr.rel (0) target = $region9
    $region8: #{tpu_custom_call.1} parent=1 // pred_region
      %s30 = sadd.s32 0, 0
      %p31 = scmp.lt.s32.totalorder %s30, 0
      %s32 = scalar_select %p31, %s30, 0
      %s33 = smul.u32 2, %s32
      %s35 = ssub.s32 256, 256
      %36 = vsyncadd [#allocation6], %s35
      %s37 = smul.addr %s33, 128
      %s38 = scalar_lea.hbm %s1, %s37
      %s39 = sshll.u32 [#allocation5], 4
      %s40 = int_to_ptr.vmem [resolvable:$true] %s39
      %45 = dma.hbm_to_vmem [thread:$0]  %s38, 256, %s40, [#allocation6], 128, 128, 8
    $region9: #{tpu_custom_call.1} parent=1 // pred_fallthru
      _
    // Predicated region
    $region10: #{tpu_custom_call.1} parent=1 // pred_check
      _
    $region11: #{tpu_custom_call.1} parent=1 // pred_check_branch
      %47 = sbr.rel (0) target = $region13
    $region12: #{tpu_custom_call.1} parent=1 // pred_region
      %48 = dma.done [#allocation3], 256
    $region13: #{tpu_custom_call.1} parent=1 // pred_fallthru
      _
    // Predicated region
    $region14: #{tpu_custom_call.1} parent=1 // pred_check
      _
    $region15: #{tpu_custom_call.1} parent=1 // pred_check_branch
      %50 = sbr.rel (0) target = $region17
    $region16: #{tpu_custom_call.1} parent=1 // pred_region
      %51 = dma.done [#allocation6], 256
    $region17: #{tpu_custom_call.1} parent=1 // pred_fallthru
      _
    %s52 = sadd.s32 0, 0
    %p53 = scmp.lt.s32.totalorder %s52, 0
    %s54 = scalar_select %p53, %s52, 0
    %s55 = smul.u32 2, %s54
    %s56 = sadd.s32 0, 0
    %p57 = scmp.lt.s32.totalorder %s56, 0
    %s58 = scalar_select %p57, %s56, 0
    %s59 = smul.u32 2, %s58
    %p60 = scmp.eq.s32.totalorder 0, 0
    // Predicated region
    $region18: #{tpu_custom_call.1} parent=1 // pred_check
      %p61 = pneg %p60
    $region19: #{tpu_custom_call.1} parent=1 // pred_check_branch
      %63 = sbr.rel (%p61) target = $region21
    $region20: #{tpu_custom_call.1} parent=1 // pred_region
      %64 = vst [vmem:[#allocation7] sm:$0xff] 0.0
    $region21: #{tpu_custom_call.1} parent=1 // pred_fallthru
      _
    %s65 = sadd.s32 0, 0
    %s66 = smul.u32 %s65, 16
    %v67 = vld [vmem:[#allocation2] sm:$0xff]
    %v68 = vld [vmem:[#allocation2 + $0x8] sm:$0xff]
    %v69 = vld [vmem:[#allocation5] sm:$0xff]
    %v70 = vld [vmem:[#allocation5 + $0x8] sm:$0xff]
    %v71 = vsub.f32 %v67, %v69
    %v72 = vsub.f32 %v68, %v70
    %v73 = vmul.f32 %v71, %v71
    %v74 = vmul.f32 %v72, %v72
    %v75 = vlaneseq
    %v76 = vshrl.u32 %v75, 7
    %v77 = vadd.s32 %v76, 8
    %v78 = vstv %s66
    %v79 = vadd.s32 %v78, %v76
    %v80 = vadd.s32 %v78, %v77
    %vm81 = vcmp.lt.s32.totalorder %v79, 16
    %vm82 = vcmp.lt.s32.totalorder %v80, 16
    %v83 = vsel %vm81, 1, 0
    %v84 = vsel %vm82, 1, 0
    %vm85 = vcmp.eq.s32.totalorder %v83, 1
    %vm86 = vcmp.eq.s32.totalorder %v84, 1
    %v87 = vsel %vm85, %v73, 0.0
    %v88 = vsel %vm86, %v74, 0.0
    %v89 = vld [vmem:[#allocation7] sm:$0xff]
    %v90 = vadd.f32 %v87, %v88
    %v91 = vadd.f32 %v89, %v90
    %92 = vst [vmem:[#allocation7] sm:$0xff] %v91
    // Predicated region
    $region22: #{tpu_custom_call.1} parent=1 // pred_check
      _
    $region23: #{tpu_custom_call.1} parent=1 // pred_check_branch
      %94 = sbr.rel (0) target = $region25
    $region24: #{tpu_custom_call.1} parent=1 // pred_region
      %s96 = ssub.s32 128, 128
      %97 = vsyncadd [#allocation4], %s96
      %s99 = sshll.u32 [#allocation7], 4
      %s100 = int_to_ptr.vmem [resolvable:$true] %s99
      %102 = dma.vmem_to_hbm [thread:$0]  %s100, 128, %s2, [#allocation4]
    $region25: #{tpu_custom_call.1} parent=1 // pred_fallthru
      _
    // Predicated region
    $region26: #{tpu_custom_call.1} parent=1 // pred_check
      _
    $region27: #{tpu_custom_call.1} parent=1 // pred_check_branch
      %104 = sbr.rel (0) target = $region29
    $region28: #{tpu_custom_call.1} parent=1 // pred_region
      %105 = dma.done [#allocation4], 128
    $region29: #{tpu_custom_call.1} parent=1 // pred_fallthru
      _
    %106 = vsyncpa [#allocation3], 1
    %107 = vsyncpa [#allocation6], 1
    %108 = vsyncpa [#allocation4], 1

</llo_original>
